<compile_context>
chip_gen: v7x
topology: tpu7x:2x2x1
jax: 0.10.0
libtpu: 0.0.40
codegen_flags: <defaults>
</compile_context>

<pallas_src>
import functools

import jax
import jax.numpy as jnp
from jax import lax
from jax.experimental import pallas as pl
from jax.experimental.pallas import tpu as pltpu


def _round_up(a, b):
    return ((a + b - 1) // b) * b


def _gram_diff_kernel(x_ref, y_ref, m_ref, *, tk, k_true, need_mask):
    """Accumulates M += (X+Y)_k @ (X-Y)_k^T over the K (axis-1) grid axis.

    x_ref / y_ref : (R, tk) tiles of input / target matrices (VMEM)
    m_ref         : (1, R, R) f32 resident partial-M accumulator (output block)
    """
    k = pl.program_id(1)

    @pl.when(k == 0)
    def _():
        m_ref[...] = jnp.zeros_like(m_ref)

    x = x_ref[...]
    y = y_ref[...]

    if need_mask:
        # Ragged last K tile: block padding past column K is garbage -> zero it.
        gk = pl.program_id(0) * pl.num_programs(1) + k   # global K-tile index
        col = lax.broadcasted_iota(jnp.int32, x.shape, 1) + gk * tk
        valid = col < k_true
        x = jnp.where(valid, x, jnp.zeros_like(x))
        y = jnp.where(valid, y, jnp.zeros_like(y))

    # One MXU matmul per step (half the FLOPs of XX^T and YY^T separately):
    #   (M + M^T)/2 == XX^T - YY^T  exactly (the cross terms cancel).
    # Contract axis 1 of both operands -> no per-tile transpose / relayout.
    xp = x + y
    xm = x - y
    dn = (((1,), (1,)), ((), ()))
    m = lax.dot_general(xp, xm, dimension_numbers=dn,
                        preferred_element_type=jnp.float32)
    m_ref[...] = m_ref[...] + m[None, :, :]


def style_loss(x, target):
    """Pallas equivalent of StyleLoss.forward(input, target)."""
    B, C, H, W = x.shape
    assert target.shape == x.shape
    R, K = B * C, H * W

    # Keep the native float dtype in HBM (bf16 stays bf16; MXU accumulates f32).
    if not jnp.issubdtype(x.dtype, jnp.floating):
        x = x.astype(jnp.float32)
        target = target.astype(jnp.float32)
    x2 = x.reshape(R, K)
    y2 = target.reshape(R, K)
    itemsize = jnp.dtype(x2.dtype).itemsize

    # ---- generation-aware VMEM budget -------------------------------------
    try:
        vmem_cap = int(pltpu.get_tpu_info().vmem_capacity_bytes)
    except Exception:
        vmem_cap = 64 * 1024 * 1024            # conservative default (v7x size)
    budget = int(vmem_cap * 0.85)              # headroom; never declare full VMEM

    rr = _round_up(R, 8)                       # sublane-padded row count
    rc = _round_up(R, 128)                     # lane-padded row count

    def vmem_need(tk_):
        tile_in = 2 * 2 * rr * tk_ * itemsize  # x,y double-buffered input tiles
        tile_tmp = 4 * rr * tk_ * itemsize     # xp / xm / mask temporaries
        acc = 3 * rr * rc * 4                  # dot result + resident M block
        return tile_in + tile_tmp + acc + (2 << 20)

    # ---- K tiling: no HBM padding; ragged tail handled in-kernel ----------
    if K <= 128:
        tk = K                                 # full-dim block is always legal
    else:
        kp = _round_up(K, 128)
        tk = 128
        for cand in (4096, 2048, 1024, 512, 256, 128):
            if cand <= K and kp % cand == 0 and vmem_need(cand) <= budget:
                tk = cand
                break
    nk_total = pl.cdiv(K, tk)
    need_mask = (nk_total * tk != K)

    # Leading "parallel" axis: split the K tiles into per-core chunks so both
    # v7x TensorCores contribute.  Only split when the tile count divides
    # evenly (keeps index maps trivial); on 1-TC chips it is a short outer
    # loop with no duplicated reads or FLOPs.
    n_par = 2 if (nk_total >= 2 and nk_total % 2 == 0) else 1
    nk_per = nk_total // n_par

    vmem_limit = int(min(max(vmem_need(tk), 32 * 1024 * 1024), budget))

    cost = pl.CostEstimate(
        flops=2 * R * R * nk_total * tk,       # one (R,tk)x(tk,R) matmul per step
        transcendentals=0,
        bytes_accessed=2 * R * K * itemsize + n_par * R * R * 4,
    )

    kernel = functools.partial(_gram_diff_kernel, tk=tk, k_true=K,
                               need_mask=need_mask)

    partial_m = pl.pallas_call(
        kernel,
        out_shape=jax.ShapeDtypeStruct((n_par, R, R), jnp.float32),
        grid_spec=pltpu.PrefetchScalarGridSpec(
            num_scalar_prefetch=0,
            grid=(n_par, nk_per),
            in_specs=[
                pl.BlockSpec((R, tk), lambda p, k: (0, p * nk_per + k)),
                pl.BlockSpec((R, tk), lambda p, k: (0, p * nk_per + k)),
            ],
            out_specs=pl.BlockSpec((1, R, R), lambda p, k: (p, 0, 0)),
        ),
        compiler_params=pltpu.CompilerParams(
            dimension_semantics=("parallel", "arbitrary"),
            vmem_limit_bytes=vmem_limit,
        ),
        cost_estimate=cost,
    )(x2, y2)

    # Tiny O(R^2) epilogue in plain XLA: sum the per-core partials, symmetrize,
    # and take the mean of squares (== F.mse_loss(Gx, Gy), 'mean' reduction).
    m = jnp.sum(partial_m, axis=0) if n_par > 1 else partial_m[0]
    d = 0.5 * (m + m.T)                        # == Gx - Gy exactly
    return jnp.mean(d * d)
    # TODO(synk): for very large B*C (R*R*4 approaching the VMEM budget), tile the
    # (R,R) output into (ti,tj) blocks on a 2-D output grid and skip j<i blocks
    # via symmetry (mutually exclusive with the single-matmul trick above).


def style_loss_ref(x, target):
    """Pure-JAX reference matching the PyTorch module."""
    B, C, H, W = x.shape
    R, K = B * C, H * W
    xm = x.reshape(R, K).astype(jnp.float32)
    ym = target.reshape(R, K).astype(jnp.float32)
    gx = xm @ xm.T
    gy = ym @ ym.T
    return jnp.mean((gx - gy) ** 2)


if __name__ == "__main__":
    key = jax.random.PRNGKey(0)
    k1, k2 = jax.random.split(key)
    # Small NCHW shapes consistent with the module's forward.
    x = jax.random.normal(k1, (2, 4, 16, 16), dtype=jnp.float32)
    t = jax.random.normal(k2, (2, 4, 16, 16), dtype=jnp.float32)

    out = style_loss(x, t)
    out = jax.block_until_ready(out)

    ref = style_loss_ref(x, t)
    assert jnp.allclose(out, ref, rtol=1e-4, atol=1e-5), (out, ref)
    print("KERNEL_OK")
</pallas_src>

<mosaic_0001>
module attributes {stable_mosaic.version = 11 : i64} {
  func.func @_gram_diff_kernel(%arg0: i32, %arg1: i32, %arg2: memref<8x256xf32, #tpu.memory_space<vmem>>, %arg3: memref<8x256xf32, #tpu.memory_space<vmem>>, %arg4: memref<1x8x8xf32, #tpu.memory_space<vmem>>) attributes {dimension_semantics = [#tpu.dimension_semantics<parallel>, #tpu.dimension_semantics<arbitrary>], iteration_bounds = array<i64: 1, 1>, scalar_prefetch = 0 : i64, scratch_operands = 0 : i64, tpu.core_type = #tpu.core_type<tc>, window_params = [{transform_indices = @transform_0, window_bounds = array<i64: 8, 256>}, {transform_indices = @transform_1, window_bounds = array<i64: 8, 256>}, {transform_indices = @transform_2, window_bounds = array<i64: 1, 8, 8>}]} {
    %c0_i32 = arith.constant 0 : i32
    %0 = arith.cmpi eq, %arg1, %c0_i32 : i32
    %1 = arith.extui %0 : i1 to i32
    %c0_i32_0 = arith.constant 0 : i32
    %2 = arith.cmpi ne, %1, %c0_i32_0 : i32
    scf.if %2 {
      %cst_10 = arith.constant 0.000000e+00 : f32
      %12 = vector.broadcast %cst_10 : f32 to vector<1x8x8xf32>
      %c0_11 = arith.constant 0 : index
      %c0_12 = arith.constant 0 : index
      %c0_13 = arith.constant 0 : index
      %13 = vector.load %arg4[%c0_11, %c0_12, %c0_13] : memref<1x8x8xf32, #tpu.memory_space<vmem>>, vector<1x8x8xf32>
      tpu.vector_store %arg4[%c0_11, %c0_12, %c0_13], %12 {strides = array<i32>} : memref<1x8x8xf32, #tpu.memory_space<vmem>>, vector<1x8x8xf32>,
    } else {
    }
    %c0 = arith.constant 0 : index
    %c0_1 = arith.constant 0 : index
    %3 = vector.load %arg2[%c0, %c0_1] : memref<8x256xf32, #tpu.memory_space<vmem>>, vector<8x256xf32>
    %c0_2 = arith.constant 0 : index
    %c0_3 = arith.constant 0 : index
    %4 = vector.load %arg3[%c0_2, %c0_3] : memref<8x256xf32, #tpu.memory_space<vmem>>, vector<8x256xf32>
    %5 = arith.addf %3, %4 : vector<8x256xf32>
    %6 = arith.subf %3, %4 : vector<8x256xf32>
    %cst = arith.constant dense<0.000000e+00> : vector<8x8xf32>
    %7 = tpu.matmul %5, %6, %cst {dimension_numbers = #tpu.dot_dimension_numbers<[1], [1], [0], [0], [0, 0, 1, 0], [], []>} : vector<8x256xf32>, vector<8x256xf32>, vector<8x8xf32> -> vector<8x8xf32>
    %c0_4 = arith.constant 0 : index
    %c0_5 = arith.constant 0 : index
    %c0_6 = arith.constant 0 : index
    %8 = vector.load %arg4[%c0_4, %c0_5, %c0_6] : memref<1x8x8xf32, #tpu.memory_space<vmem>>, vector<1x8x8xf32>
    %9 = vector.shape_cast %7 : vector<8x8xf32> to vector<1x8x8xf32>
    %10 = arith.addf %8, %9 : vector<1x8x8xf32>
    %c0_7 = arith.constant 0 : index
    %c0_8 = arith.constant 0 : index
    %c0_9 = arith.constant 0 : index
    %11 = vector.load %arg4[%c0_7, %c0_8, %c0_9] : memref<1x8x8xf32, #tpu.memory_space<vmem>>, vector<1x8x8xf32>
    tpu.vector_store %arg4[%c0_7, %c0_8, %c0_9], %10 {strides = array<i32>} : memref<1x8x8xf32, #tpu.memory_space<vmem>>, vector<1x8x8xf32>,
    return
  }
  func.func @transform_0(%arg0: i32, %arg1: i32) -> (i32, i32) {
    %c1_i32 = arith.constant 1 : i32
    %0 = arith.muli %arg0, %c1_i32 : i32
    %1 = arith.addi %0, %arg1 : i32
    %c0_i32 = arith.constant 0 : i32
    %c0_i32_0 = arith.constant 0 : i32
    return %c0_i32, %1 : i32, i32
  }
  func.func @transform_1(%arg0: i32, %arg1: i32) -> (i32, i32) {
    %c1_i32 = arith.constant 1 : i32
    %0 = arith.muli %arg0, %c1_i32 : i32
    %1 = arith.addi %0, %arg1 : i32
    %c0_i32 = arith.constant 0 : i32
    %c0_i32_0 = arith.constant 0 : i32
    return %c0_i32, %1 : i32, i32
  }
  func.func @transform_2(%arg0: i32, %arg1: i32) -> (i32, i32, i32) {
    %c0_i32 = arith.constant 0 : i32
    %c0_i32_0 = arith.constant 0 : i32
    %c0_i32_1 = arith.constant 0 : i32
    return %arg0, %c0_i32, %c0_i32_0 : i32, i32, i32
  }
}

</mosaic_0001>

<llo_original>
// kernel: tpu_custom_call.1
$region0: #{tpu_custom_call.1}
  #allocation0 [shape = 'u32[]', space=smem, size = 0x4, offset = 0x4, fixed_abs, tag = 'smem constant byte address 0x4 - core index']
  #allocation1 [shape = 'u32[144,128]{1,0:T(1,128)}', space=vmem, size = 0x12000, scoped, tag = 'internal scratch']
  %s0 = inlined_call_operand.hbm [shape: f32[8,256], index: 0, kind: input, shape index: {}]
  %s1 = inlined_call_operand.hbm [shape: f32[8,256], index: 1, kind: input, shape index: {}]
  %s2 = inlined_call_operand.hbm [shape: f32[1,8,8], index: 2, kind: output, shape index: {}]
  %s3 = sld [smem:[#allocation0]]
  $region30: #{tpu_custom_call.1} parent=0
    _
  %s5 = ssub.s32 1, %s3
  %s6 = scalar_select 0, %s5, %s3
  $region1: #{tpu_custom_call.1} parent=0
    #allocation2 [shape = 'u8[8192]{0}', space=vmem, size = 0x2000, scoped, tag = 'input window, operand 0, single buffered']
    #allocation3 [shape = 's32[1]{0}', space=sflag, size = 0x4, scoped, tag = 'scoped memory for tpu_custom_call.1']
    #allocation4 [shape = 's32[1]{0}', space=sflag, size = 0x4, scoped, tag = 'scoped memory for tpu_custom_call.1']
    #allocation5 [shape = 'u8[8192]{0}', space=vmem, size = 0x2000, scoped, tag = 'input window, operand 1, single buffered']
    #allocation6 [shape = 's32[1]{0}', space=sflag, size = 0x4, scoped, tag = 'scoped memory for tpu_custom_call.1']
    #allocation7 [shape = 'u8[4096]{0}', space=vmem, size = 0x1000, scoped, tag = 'output window, operand 0, single buffered']
    %7 = vsyncpa [#allocation3], 0
    %8 = vsyncpa [#allocation6], 0
    %9 = vsyncpa [#allocation4], 0
    // Predicated region
    $region2: #{tpu_custom_call.1} parent=1 // pred_check
      _
    $region3: #{tpu_custom_call.1} parent=1 // pred_check_branch
      %11 = sbr.rel (0) target = $region5
    $region4: #{tpu_custom_call.1} parent=1 // pred_region
      %s12 = sadd.s32 0, 0
      %s13 = smul.u32 2, %s12
      %s15 = ssub.s32 256, 256
      %16 = vsyncadd [#allocation3], %s15
      %s17 = smul.addr %s13, 128
      %s18 = scalar_lea.hbm %s0, %s17
      %s20 = sshll.u32 [#allocation2], 4
      %s21 = int_to_ptr.vmem [resolvable:$true] %s20
      %23 = dma.hbm_to_vmem [thread:$0]  %s18, 256, %s21, [#allocation3]
    $region5: #{tpu_custom_call.1} parent=1 // pred_fallthru
      _
    // Predicated region
    $region6: #{tpu_custom_call.1} parent=1 // pred_check
      _
    $region7: #{tpu_custom_call.1} parent=1 // pred_check_branch
      %25 = sbr.rel (0) target = $region9
    $region8: #{tpu_custom_call.1} parent=1 // pred_region
      %s26 = sadd.s32 0, 0
      %s27 = smul.u32 2, %s26
      %s29 = ssub.s32 256, 256
      %30 = vsyncadd [#allocation6], %s29
      %s31 = smul.addr %s27, 128
      %s32 = scalar_lea.hbm %s1, %s31
      %s34 = sshll.u32 [#allocation5], 4
      %s35 = int_to_ptr.vmem [resolvable:$true] %s34
      %37 = dma.hbm_to_vmem [thread:$0]  %s32, 256, %s35, [#allocation6]
    $region9: #{tpu_custom_call.1} parent=1 // pred_fallthru
      _
    // Predicated region
    $region10: #{tpu_custom_call.1} parent=1 // pred_check
      _
    $region11: #{tpu_custom_call.1} parent=1 // pred_check_branch
      %39 = sbr.rel (0) target = $region13
    $region12: #{tpu_custom_call.1} parent=1 // pred_region
      %40 = dma.done [#allocation3], 256
    $region13: #{tpu_custom_call.1} parent=1 // pred_fallthru
      _
    // Predicated region
    $region14: #{tpu_custom_call.1} parent=1 // pred_check
      _
    $region15: #{tpu_custom_call.1} parent=1 // pred_check_branch
      %42 = sbr.rel (0) target = $region17
    $region16: #{tpu_custom_call.1} parent=1 // pred_region
      %43 = dma.done [#allocation6], 256
    $region17: #{tpu_custom_call.1} parent=1 // pred_fallthru
      _
    %s44 = sadd.s32 0, 0
    %s45 = smul.u32 2, %s44
    %s46 = sadd.s32 0, 0
    %s47 = smul.u32 2, %s46
    %p48 = scmp.eq.s32.totalorder 0, 0
    // Predicated region
    $region18: #{tpu_custom_call.1} parent=1 // pred_check
      %p49 = pneg %p48
    $region19: #{tpu_custom_call.1} parent=1 // pred_check_branch
      %51 = sbr.rel (%p49) target = $region21
    $region20: #{tpu_custom_call.1} parent=1 // pred_region
      %vm52 = vcmask 64512
      %53 = vst.msk [vmem:[#allocation7] sm:$0xff] %vm52, 0.0
    $region21: #{tpu_custom_call.1} parent=1 // pred_fallthru
      _
    %v54 = vld [vmem:[#allocation2] sm:$0xff]
    %v55 = vld [vmem:[#allocation2 + $0x8] sm:$0xff]
    %v56 = vld [vmem:[#allocation5] sm:$0xff]
    %v57 = vld [vmem:[#allocation5 + $0x8] sm:$0xff]
    %v58 = vadd.f32 %v54, %v56
    %v59 = vadd.f32 %v55, %v57
    %v60 = vsub.f32 %v54, %v56
    %v61 = vsub.f32 %v55, %v57
    %62 = vmatprep.subr.mxu0 %v61
    %63 = vmatpush1.xpose.msra.mxu0 %v60
    %64 = vmatprep.subr.mxu0 0.0
    %65 = vmatpush1.xpose.msra.mxu0 0.0
    %66 = vmatprep.subr.mxu0 0.0
    %67 = vmatpush1.xpose.msra.mxu0 0.0
    %68 = vmatprep.subr.mxu0 0.0
    %69 = vmatpush1.xpose.msra.mxu0 0.0
    %70 = vmatprep.subr.mxu0 0.0
    %71 = vmatpush1.xpose.msra.mxu0 0.0
    %72 = vmatprep.subr.mxu0 0.0
    %73 = vmatpush1.xpose.msra.mxu0 0.0
    %74 = vmatprep.subr.mxu0 0.0
    %75 = vmatpush1.xpose.msra.mxu0 0.0
    %76 = vmatprep.subr.mxu0 0.0
    %77 = vmatpush1.xpose.msra.mxu0 0.0
    %78 = vmatprep.subr.mxu0 0.0
    %79 = vmatpush1.xpose.msra.mxu0 0.0
    %80 = vmatprep.subr.mxu0 0.0
    %81 = vmatpush1.xpose.msra.mxu0 0.0
    %82 = vmatprep.subr.mxu0 0.0
    %83 = vmatpush1.xpose.msra.mxu0 0.0
    %84 = vmatprep.subr.mxu0 0.0
    %85 = vmatpush1.xpose.msra.mxu0 0.0
    %86 = vmatprep.subr.mxu0 0.0
    %87 = vmatpush1.xpose.msra.mxu0 0.0
    %88 = vmatprep.subr.mxu0 0.0
    %89 = vmatpush1.xpose.msra.mxu0 0.0
    %90 = vmatprep.subr.mxu0 0.0
    %91 = vmatpush1.xpose.msra.mxu0 0.0
    %92 = vmatprep.subr.mxu0 0.0
    %93 = vmatpush1.xpose.msra.mxu0 0.0
    %94 = vmatprep.subr.mxu0 0.0
    %95 = vmatpush1.xpose.msra.mxu0 0.0
    %96 = vmatprep.subr.mxu0 0.0
    %97 = vmatpush1.xpose.msra.mxu0 0.0
    %98 = vmatprep.subr.mxu0 0.0
    %99 = vmatpush1.xpose.msra.mxu0 0.0
    %100 = vmatprep.subr.mxu0 0.0
    %101 = vmatpush1.xpose.msra.mxu0 0.0
    %102 = vmatprep.subr.mxu0 0.0
    %103 = vmatpush1.xpose.msra.mxu0 0.0
    %104 = vmatprep.subr.mxu0 0.0
    %105 = vmatpush1.xpose.msra.mxu0 0.0
    %106 = vmatprep.subr.mxu0 0.0
    %107 = vmatpush1.xpose.msra.mxu0 0.0
    %108 = vmatprep.subr.mxu0 0.0
    %109 = vmatpush1.xpose.msra.mxu0 0.0
    %110 = vmatprep.subr.mxu0 0.0
    %111 = vmatpush1.xpose.msra.mxu0 0.0
    %112 = vmatprep.subr.mxu0 0.0
    %113 = vmatpush1.xpose.msra.mxu0 0.0
    %114 = vmatprep.subr.mxu0 0.0
    %115 = vmatpush1.xpose.msra.mxu0 0.0
    %116 = vmatprep.subr.mxu0 0.0
    %117 = vmatpush1.xpose.msra.mxu0 0.0
    %118 = vmatprep.subr.mxu0 0.0
    %119 = vmatpush1.xpose.msra.mxu0 0.0
    %120 = vmatprep.subr.mxu0 0.0
    %121 = vmatpush1.xpose.msra.mxu0 0.0
    %122 = vmatprep.subr.mxu0 0.0
    %123 = vmatpush1.xpose.msra.mxu0 0.0
    %124 = vmatprep.subr.mxu0 0.0
    %125 = vmatpush1.xpose.msra.mxu0 0.0
    %126 = vmatprep.mubr.f32.mxu0 %v59
    %127 = vmatmul.mubr.f32.gmra.mrb[0].mxu0 %v58
    %v128 = vpop.f32.mrb[0].mxu0
    %v129 = vadd.f32 0.0, %v128
    %v130 = vpop.f32.mrb[0].mxu0
    %131 = vdwg.mxu0
    %v132 = vld [vmem:[#allocation7] sm:$0xff]
    %v133 = vadd.f32 %v132, %v129
    %vm134 = vcmask 64512
    %135 = vst.msk [vmem:[#allocation7] sm:$0xff] %vm134, %v133
    // Predicated region
    $region22: #{tpu_custom_call.1} parent=1 // pred_check
      _
    $region23: #{tpu_custom_call.1} parent=1 // pred_check_branch
      %137 = sbr.rel (0) target = $region25
    $region24: #{tpu_custom_call.1} parent=1 // pred_region
      %s139 = ssub.s32 128, 128
      %140 = vsyncadd [#allocation4], %s139
      %s142 = sshll.u32 [#allocation7], 4
      %s143 = int_to_ptr.vmem [resolvable:$true] %s142
      %145 = dma.vmem_to_hbm [thread:$0]  %s143, 128, %s2, [#allocation4]
    $region25: #{tpu_custom_call.1} parent=1 // pred_fallthru
      _
    // Predicated region
    $region26: #{tpu_custom_call.1} parent=1 // pred_check
      _
    $region27: #{tpu_custom_call.1} parent=1 // pred_check_branch
      %147 = sbr.rel (0) target = $region29
    $region28: #{tpu_custom_call.1} parent=1 // pred_region
      %148 = dma.done [#allocation4], 128
    $region29: #{tpu_custom_call.1} parent=1 // pred_fallthru
      _
    %149 = vsyncpa [#allocation3], 1
    %150 = vsyncpa [#allocation6], 1
    %151 = vsyncpa [#allocation4], 1

</llo_original>
